<compile_context>
chip_gen: v6e
topology: v6e:2x2x1
jax: 0.10.0
libtpu: 0.0.40
codegen_flags: <defaults>
</compile_context>

<pallas_src>
import jax
import jax.numpy as jnp
import numpy as np
from jax.experimental import pallas as pl
from jax.experimental.pallas import tpu as pltpu


def _round_up(x, m):
    return (x + m - 1) // m * m


def facts_converter_kernel(z_ref, w_ref, c_ref, v_ref):
    # z_ref : (TB, F)      f32, batch tile of flattened perception features
    # w_ref : (F, A_pad)   f32, per-np-atom valuation weights (0 elsewhere)
    # c_ref : (3, A_pad)   f32, row0=bias, row1=np mask, row2=base (init+bk adds)
    # v_ref : (TB, A_pad)  output valuation tile (f32 or bf16)
    logits = jnp.dot(z_ref[...], w_ref[...], preferred_element_type=jnp.float32)
    bias = c_ref[0:1, :]
    mask = c_ref[1:2, :]
    base = c_ref[2:3, :]
    vals = jax.nn.sigmoid(logits + bias)                    # EUP, f32
    v_ref[...] = (base + mask * vals).astype(v_ref.dtype)   # VPU fma, lane-dense store


def build_dense_tables(w_t, bias, n_atoms, np_indices, bk_indices, a_pad):
    """Fold valuation weights + one-hot scatter + bk adds into dense, lane-padded tables."""
    w_t = np.asarray(w_t, dtype=np.float32)
    bias = np.asarray(bias, dtype=np.float32).reshape(-1)
    F, n_np = w_t.shape
    assert len(np_indices) == n_np
    w_dense = np.zeros((F, a_pad), dtype=np.float32)
    consts = np.zeros((3, a_pad), dtype=np.float32)   # row0 bias, row1 mask, row2 base
    # Column-wise writes: last write wins for duplicate np indices, matching the
    # PyTorch overwrite order (a naive scatter-matmul would have summed them).
    for slot, atom_idx in enumerate(np_indices):
        w_dense[:, atom_idx] = w_t[:, slot]
        consts[0, atom_idx] = bias[slot]
        consts[1, atom_idx] = 1.0
    # V[:, 0] = 1.0 happens BEFORE the np assignments; survives only if atom 0 is not np.
    if 0 not in np_indices:
        consts[2, 0] = 1.0
    # Background-knowledge atoms get +1.0 AFTER the np assignments (pure add).
    for atom_idx in bk_indices:
        consts[2, atom_idx] += 1.0
    return jnp.asarray(w_dense), jnp.asarray(consts)


def facts_converter_forward(z, w_dense, consts, *, out_dtype=jnp.float32,
                            tb_max=2048, min_tiles=2):
    """Returns V of shape (B, A_pad); columns >= n_atoms are exact zeros."""
    B = z.shape[0]
    F, A_pad = w_dense.shape
    # Metadata-only reshape; no f32/bf16 cast passes, no bias-column concat.
    z_flat = z.reshape(B, -1)
    assert z_flat.shape[1] == F and z_flat.dtype == jnp.float32

    # Tile selection: rows rounded to the f32 sublane multiple (8); for large B
    # guarantee >= min_tiles grid steps so v7x can shard the batch over its 2 TCs,
    # while keeping tiles as big as possible (<= tb_max) to amortize per-step overhead.
    tb = _round_up(pl.cdiv(B, min_tiles), 8)
    tb = max(8, min(tb, tb_max))
    b_pad = _round_up(B, tb)
    if b_pad != B:
        z_flat = jnp.pad(z_flat, ((0, b_pad - B), (0, 0)))
    grid = (b_pad // tb,)

    # Explicit VMEM budget: double-buffered tiles + resident tables with headroom,
    # capped at 32 MiB so the same config is safe inside v7x's 64 MiB VMEM.
    out_bytes = jnp.dtype(out_dtype).itemsize
    need = (2 * (tb * F * 4 + tb * A_pad * out_bytes)
            + 2 * (_round_up(F, 8) * A_pad * 4 + 8 * A_pad * 4))
    vmem_bytes = int(min(max(2 * need, 4 * 1024 * 1024), 32 * 1024 * 1024))

    out = pl.pallas_call(
        facts_converter_kernel,
        out_shape=jax.ShapeDtypeStruct((b_pad, A_pad), out_dtype),
        grid_spec=pltpu.PrefetchScalarGridSpec(
            num_scalar_prefetch=0,
            grid=grid,
            in_specs=[
                pl.BlockSpec((tb, F), lambda i: (i, 0)),       # streamed batch tile
                pl.BlockSpec((F, A_pad), lambda i: (0, 0)),    # resident weights
                pl.BlockSpec((3, A_pad), lambda i: (0, 0)),    # resident bias/mask/base
            ],
            out_specs=pl.BlockSpec((tb, A_pad), lambda i: (i, 0)),
        ),
        compiler_params=pltpu.CompilerParams(
            dimension_semantics=("parallel",),     # v7x: shard batch over 2 TCs
            vmem_limit_bytes=vmem_bytes,
        ),
    )(z_flat, w_dense, consts)
    # Padded atom columns are exact zeros and stay attached (no column slice-copy).
    # Padded batch rows would contain garbage, so only those are trimmed (cheap,
    # and a no-op when B is already a tile multiple).
    return out if b_pad == B else out[:B]


def reference_forward(z, w_t, bias, np_indices, bk_indices, n_atoms):
    """Pure-JAX f32 reference mirroring the PyTorch loop semantics."""
    B = z.shape[0]
    z_flat = z.reshape(B, -1).astype(jnp.float32)
    V = jnp.zeros((B, n_atoms), dtype=jnp.float32)
    V = V.at[:, 0].set(1.0)
    vals = jax.nn.sigmoid(z_flat @ w_t + bias)            # (B, N_np)
    for slot, i in enumerate(np_indices):
        V = V.at[:, i].set(vals[:, slot])
    for i in bk_indices:
        V = V.at[:, i].add(1.0)
    return V


def _run_case(Z, W_T, bias, np_indices, bk_indices, n_atoms):
    A_pad = _round_up(max(n_atoms, 128), 128)       # lane-dense output width
    w_dense, consts = build_dense_tables(W_T, bias, n_atoms, np_indices,
                                         bk_indices, A_pad)
    V = facts_converter_forward(Z, w_dense, consts)
    V = jax.block_until_ready(V)
    V = np.asarray(V)
    V_ref = np.asarray(reference_forward(Z, W_T, bias, np_indices, bk_indices, n_atoms))
    # f32 kernel path; tolerance covers any reduced-precision MXU pass choice.
    np.testing.assert_allclose(V[:, :n_atoms], V_ref, rtol=5e-3, atol=5e-3)
    # Padded atom columns must be exact zeros (they are returned, not sliced off).
    assert np.all(V[:, n_atoms:] == 0.0)


if __name__ == "__main__":
    # Z: perception output (batch, entities, per-entity feature dim).
    B, E, D = 2, 4, 8
    F = E * D
    n_atoms = 16
    np_indices = [2, 3, 4, 5, 6, 7, 8, 9]   # atoms with NeuralPredicate
    bk_indices = [1, 10, 11]                # atoms in background knowledge
    n_np = len(np_indices)

    key = jax.random.PRNGKey(0)
    k_z, k_w, k_b = jax.random.split(key, 3)
    Z = jax.random.normal(k_z, (B, E, D), dtype=jnp.float32)
    # TODO(synk): the real valuation_module dispatches symbolic per-predicate
    # functions; it is modeled here as a deterministic linear+sigmoid valuation.
    W_T = 0.1 * jax.random.normal(k_w, (F, n_np), dtype=jnp.float32)
    bias = 0.1 * jax.random.normal(k_b, (1, n_np), dtype=jnp.float32)

    _run_case(Z, W_T, bias, np_indices, bk_indices, n_atoms)

    # Duplicate np indices: last write must win (matches PyTorch overwrite order).
    np_dup = [2, 3, 3, 5]
    k_w2, k_b2 = jax.random.split(k_b, 2)
    W_T2 = 0.1 * jax.random.normal(k_w2, (F, len(np_dup)), dtype=jnp.float32)
    bias2 = 0.1 * jax.random.normal(k_b2, (1, len(np_dup)), dtype=jnp.float32)
    _run_case(Z, W_T2, bias2, np_dup, bk_indices, n_atoms)

    print("KERNEL_OK")
</pallas_src>

<mosaic_0001>
module attributes {stable_mosaic.version = 11 : i64} {
  func.func @facts_converter_kernel(%arg0: i32, %arg1: memref<8x32xf32, #tpu.memory_space<vmem>>, %arg2: memref<32x128xf32, #tpu.memory_space<vmem>>, %arg3: memref<3x128xf32, #tpu.memory_space<vmem>>, %arg4: memref<8x128xf32, #tpu.memory_space<vmem>>) attributes {dimension_semantics = [#tpu.dimension_semantics<parallel>], iteration_bounds = array<i64: 1>, scalar_prefetch = 0 : i64, scratch_operands = 0 : i64, tpu.core_type = #tpu.core_type<tc>, window_params = [{transform_indices = @transform_0, window_bounds = array<i64: 8, 32>}, {pipeline_mode = #tpu.pipeline_mode<synchronous>, transform_indices = @transform_1, window_bounds = array<i64: 32, 128>}, {pipeline_mode = #tpu.pipeline_mode<synchronous>, transform_indices = @transform_2, window_bounds = array<i64: 3, 128>}, {transform_indices = @transform_3, window_bounds = array<i64: 8, 128>}]} {
    %c0 = arith.constant 0 : index
    %c0_0 = arith.constant 0 : index
    %0 = vector.load %arg1[%c0, %c0_0] : memref<8x32xf32, #tpu.memory_space<vmem>>, vector<8x32xf32>
    %c0_1 = arith.constant 0 : index
    %c0_2 = arith.constant 0 : index
    %1 = vector.load %arg2[%c0_1, %c0_2] : memref<32x128xf32, #tpu.memory_space<vmem>>, vector<32x128xf32>
    %cst = arith.constant dense<0.000000e+00> : vector<8x128xf32>
    %2 = tpu.matmul %0, %1, %cst {dimension_numbers = #tpu.dot_dimension_numbers<[1], [0], [0], [1], [0, 0, 1, 1], [], []>} : vector<8x32xf32>, vector<32x128xf32>, vector<8x128xf32> -> vector<8x128xf32>
    %c0_3 = arith.constant 0 : index
    %c0_4 = arith.constant 0 : index
    %3 = vector.load %arg3[%c0_3, %c0_4] : memref<3x128xf32, #tpu.memory_space<vmem>>, vector<1x128xf32>
    %c1 = arith.constant 1 : index
    %c0_5 = arith.constant 0 : index
    %4 = vector.load %arg3[%c1, %c0_5] : memref<3x128xf32, #tpu.memory_space<vmem>>, vector<1x128xf32>
    %c2 = arith.constant 2 : index
    %c0_6 = arith.constant 0 : index
    %5 = vector.load %arg3[%c2, %c0_6] : memref<3x128xf32, #tpu.memory_space<vmem>>, vector<1x128xf32>
    %6 = vector.broadcast %3 : vector<1x128xf32> to vector<8x128xf32>
    %7 = arith.addf %2, %6 : vector<8x128xf32>
    %8 = arith.negf %7 : vector<8x128xf32>
    %9 = math.exp %8 : vector<8x128xf32>
    %cst_7 = arith.constant 1.000000e+00 : f32
    %10 = vector.broadcast %cst_7 : f32 to vector<8x128xf32>
    %11 = arith.addf %10, %9 : vector<8x128xf32>
    %12 = arith.divf %10, %11 : vector<8x128xf32>
    %13 = vector.broadcast %4 : vector<1x128xf32> to vector<8x128xf32>
    %14 = arith.mulf %13, %12 : vector<8x128xf32>
    %15 = vector.broadcast %5 : vector<1x128xf32> to vector<8x128xf32>
    %16 = arith.addf %15, %14 : vector<8x128xf32>
    %c0_8 = arith.constant 0 : index
    %c0_9 = arith.constant 0 : index
    %17 = vector.load %arg4[%c0_8, %c0_9] : memref<8x128xf32, #tpu.memory_space<vmem>>, vector<8x128xf32>
    tpu.vector_store %arg4[%c0_8, %c0_9], %16 {strides = array<i32>} : memref<8x128xf32, #tpu.memory_space<vmem>>, vector<8x128xf32>,
    return
  }
  func.func @transform_0(%arg0: i32) -> (i32, i32) {
    %c0_i32 = arith.constant 0 : i32
    %c0_i32_0 = arith.constant 0 : i32
    return %arg0, %c0_i32 : i32, i32
  }
  func.func @transform_1(%arg0: i32) -> (i32, i32) {
    %c0_i32 = arith.constant 0 : i32
    %c0_i32_0 = arith.constant 0 : i32
    %c0_i32_1 = arith.constant 0 : i32
    return %c0_i32, %c0_i32_0 : i32, i32
  }
  func.func @transform_2(%arg0: i32) -> (i32, i32) {
    %c0_i32 = arith.constant 0 : i32
    %c0_i32_0 = arith.constant 0 : i32
    %c0_i32_1 = arith.constant 0 : i32
    return %c0_i32, %c0_i32_0 : i32, i32
  }
  func.func @transform_3(%arg0: i32) -> (i32, i32) {
    %c0_i32 = arith.constant 0 : i32
    %c0_i32_0 = arith.constant 0 : i32
    return %arg0, %c0_i32 : i32, i32
  }
}

</mosaic_0001>

<llo_original>
// kernel: tpu_custom_call.1
$region0: #{tpu_custom_call.1}
  #allocation0 [shape = 'u32[]', space=smem, size = 0x4, offset = 0x4, fixed_abs, tag = 'smem constant byte address 0x4 - core index']
  #allocation1 [shape = 'u32[144,128]{1,0:T(1,128)}', space=vmem, size = 0x12000, scoped, tag = 'internal scratch']
  %s0 = inlined_call_operand.hbm [shape: f32[8,32], index: 0, kind: input, shape index: {}]
  %s1 = inlined_call_operand.hbm [shape: f32[32,128], index: 1, kind: input, shape index: {}]
  %s2 = inlined_call_operand.hbm [shape: f32[3,128], index: 2, kind: input, shape index: {}]
  %s3 = inlined_call_operand.hbm [shape: f32[8,128], index: 3, kind: output, shape index: {}]
  %s4 = sld [smem:[#allocation0]]
  $region34: #{tpu_custom_call.1} parent=0
    _
  %s6 = ssub.s32 1, %s4
  %s7 = scalar_select 0, %s6, %s4
  $region1: #{tpu_custom_call.1} parent=0
    #allocation2 [shape = 'u8[4096]{0}', space=vmem, size = 0x1000, scoped, tag = 'input window, operand 0, single buffered']
    #allocation3 [shape = 's32[1]{0}', space=sflag, size = 0x4, scoped, tag = 'scoped memory for tpu_custom_call.1']
    #allocation4 [shape = 's32[1]{0}', space=sflag, size = 0x4, scoped, tag = 'scoped memory for tpu_custom_call.1']
    #allocation5 [shape = 'u8[16384]{0}', space=vmem, size = 0x4000, scoped, tag = 'input window, operand 1, single buffered']
    #allocation6 [shape = 's32[1]{0}', space=sflag, size = 0x4, scoped, tag = 'scoped memory for tpu_custom_call.1']
    #allocation7 [shape = 'u8[2048]{0}', space=vmem, size = 0x800, scoped, tag = 'input window, operand 2, single buffered']
    #allocation8 [shape = 'u8[4096]{0}', space=vmem, size = 0x1000, scoped, tag = 'output window, operand 0, single buffered']
    %8 = vsyncpa [#allocation3], 0
    %9 = vsyncpa [#allocation6], 0
    %10 = vsyncpa [#allocation4], 0
    // Predicated region
    $region2: #{tpu_custom_call.1} parent=1 // pred_check
      _
    $region3: #{tpu_custom_call.1} parent=1 // pred_check_branch
      %12 = sbr.rel (0) target = $region5
    $region4: #{tpu_custom_call.1} parent=1 // pred_region
      %s14 = ssub.s32 128, 128
      %15 = vsyncadd [#allocation3], %s14
      %s17 = sshll.u32 [#allocation2], 4
      %s18 = int_to_ptr.vmem [resolvable:$true] %s17
      %20 = dma.hbm_to_vmem [thread:$0]  %s0, 128, %s18, [#allocation3]
    $region5: #{tpu_custom_call.1} parent=1 // pred_fallthru
      _
    // Predicated region
    $region6: #{tpu_custom_call.1} parent=1 // pred_check
      _
    $region7: #{tpu_custom_call.1} parent=1 // pred_check_branch
      %22 = sbr.rel (0) target = $region9
    $region8: #{tpu_custom_call.1} parent=1 // pred_region
      %s24 = ssub.s32 512, 512
      %25 = vsyncadd [#allocation6], %s24
      %s26 = sshll.u32 [#allocation5], 4
      %s27 = int_to_ptr.vmem [resolvable:$true] %s26
      %32 = dma.hbm_to_vmem [thread:$0]  %s1, 512, %s27, [#allocation6], 128, 128, 8
    $region9: #{tpu_custom_call.1} parent=1 // pred_fallthru
      _
    // Predicated region
    $region10: #{tpu_custom_call.1} parent=1 // pred_check
      _
    $region11: #{tpu_custom_call.1} parent=1 // pred_check_branch
      %34 = sbr.rel (0) target = $region13
    $region12: #{tpu_custom_call.1} parent=1 // pred_region
      %s36 = ssub.s32 64, 64
      %37 = vsyncadd [#allocation6], %s36
      %s39 = sshll.u32 [#allocation7], 4
      %s40 = int_to_ptr.vmem [resolvable:$true] %s39
      %42 = dma.hbm_to_vmem [thread:$0]  %s2, 64, %s40, [#allocation6]
    $region13: #{tpu_custom_call.1} parent=1 // pred_fallthru
      _
    // Predicated region
    $region14: #{tpu_custom_call.1} parent=1 // pred_check
      _
    $region15: #{tpu_custom_call.1} parent=1 // pred_check_branch
      %44 = sbr.rel (0) target = $region17
    $region16: #{tpu_custom_call.1} parent=1 // pred_region
      %45 = dma.done [#allocation3], 128
    $region17: #{tpu_custom_call.1} parent=1 // pred_fallthru
      _
    // Predicated region
    $region18: #{tpu_custom_call.1} parent=1 // pred_check
      _
    $region19: #{tpu_custom_call.1} parent=1 // pred_check_branch
      %47 = sbr.rel (0) target = $region21
    $region20: #{tpu_custom_call.1} parent=1 // pred_region
      %48 = dma.done [#allocation6], 512
    $region21: #{tpu_custom_call.1} parent=1 // pred_fallthru
      _
    // Predicated region
    $region22: #{tpu_custom_call.1} parent=1 // pred_check
      _
    $region23: #{tpu_custom_call.1} parent=1 // pred_check_branch
      %50 = sbr.rel (0) target = $region25
    $region24: #{tpu_custom_call.1} parent=1 // pred_region
      %51 = dma.done [#allocation6], 64
    $region25: #{tpu_custom_call.1} parent=1 // pred_fallthru
      _
    %v52 = vld [vmem:[#allocation2] sm:$0xff]
    %v53 = vld [vmem:[#allocation5] sm:$0xff]
    %v54 = vld [vmem:[#allocation5 + $0x8] sm:$0xff]
    %v55 = vld [vmem:[#allocation5 + $0x10] sm:$0xff]
    %v56 = vld [vmem:[#allocation5 + $0x18] sm:$0xff]
    %v57 = vld [vmem:[#allocation7] sm:$0x1]
    %v58 = vld [vmem:[#allocation7 + $0x1] sm:$0x1]
    %v59 = vld [vmem:[#allocation7 + $0x2] sm:$0x1]
    %v60 = vlaneseq
    %v61 = vshrl.u32 %v60, 7
    %v62 = vsub.s32 0, %v61
    %v63 = vrot.slane %v57, %v62
    %vm64 = vcmask 261120
    %v66 = vsel %vm64, %v52, 0
    %68 = vmatprep.subr.mxu0 0.0
    %69 = vmatpush1.msra.mxu0 0.0
    %70 = vmatprep.subr.mxu0 0.0
    %71 = vmatpush1.msra.mxu0 0.0
    %72 = vmatprep.subr.mxu0 0.0
    %73 = vmatpush1.msra.mxu0 0.0
    %74 = vmatprep.subr.mxu0 0.0
    %75 = vmatpush1.msra.mxu0 0.0
    %76 = vmatprep.subr.mxu0 0.0
    %77 = vmatpush1.msra.mxu0 0.0
    %78 = vmatprep.subr.mxu0 0.0
    %79 = vmatpush1.msra.mxu0 0.0
    %80 = vmatprep.subr.mxu0 0.0
    %81 = vmatpush1.msra.mxu0 0.0
    %82 = vmatprep.subr.mxu0 0.0
    %83 = vmatpush1.msra.mxu0 0.0
    %84 = vmatprep.subr.mxu0 0.0
    %85 = vmatpush1.msra.mxu0 0.0
    %86 = vmatprep.subr.mxu0 0.0
    %87 = vmatpush1.msra.mxu0 0.0
    %88 = vmatprep.subr.mxu0 0.0
    %89 = vmatpush1.msra.mxu0 0.0
    %90 = vmatprep.subr.mxu0 0.0
    %91 = vmatpush1.msra.mxu0 0.0
    %92 = vmatprep.subr.mxu0 0.0
    %93 = vmatpush1.msra.mxu0 %v56
    %94 = vmatprep.subr.mxu0 0.0
    %95 = vmatpush1.msra.mxu0 %v55
    %96 = vmatprep.subr.mxu0 0.0
    %97 = vmatpush1.msra.mxu0 %v54
    %98 = vmatprep.subr.mxu0 0.0
    %99 = vmatpush1.msra.mxu0 %v53
    %100 = vmatprep.subr.mxu0 0.0
    %101 = vmatpush2.msra.mxu0 0.0
    %102 = vmatprep.subr.mxu0 0.0
    %103 = vmatpush2.msra.mxu0 0.0
    %104 = vmatprep.subr.mxu0 0.0
    %105 = vmatpush2.msra.mxu0 0.0
    %106 = vmatprep.subr.mxu0 0.0
    %107 = vmatpush2.msra.mxu0 0.0
    %108 = vmatprep.subr.mxu0 0.0
    %109 = vmatpush2.msra.mxu0 0.0
    %110 = vmatprep.subr.mxu0 0.0
    %111 = vmatpush2.msra.mxu0 0.0
    %112 = vmatprep.subr.mxu0 0.0
    %113 = vmatpush2.msra.mxu0 0.0
    %114 = vmatprep.subr.mxu0 0.0
    %115 = vmatpush2.msra.mxu0 0.0
    %116 = vmatprep.subr.mxu0 0.0
    %117 = vmatpush2.msra.mxu0 0.0
    %118 = vmatprep.subr.mxu0 0.0
    %119 = vmatpush2.msra.mxu0 0.0
    %120 = vmatprep.subr.mxu0 0.0
    %121 = vmatpush2.msra.mxu0 0.0
    %122 = vmatprep.subr.mxu0 0.0
    %123 = vmatpush2.msra.mxu0 0.0
    %124 = vmatprep.subr.mxu0 0.0
    %125 = vmatpush2.msra.mxu0 0.0
    %126 = vmatprep.subr.mxu0 0.0
    %127 = vmatpush2.msra.mxu0 0.0
    %128 = vmatprep.subr.mxu0 0.0
    %129 = vmatpush2.msra.mxu0 0.0
    %130 = vmatprep.subr.mxu0 0.0
    %131 = vmatpush2.msra.mxu0 0.0
    %132 = vmatprep.mubr.f32.mxu0 0.0
    %133 = vmatmul.mubr.f32.gmra.mxu0 %v66
    %v134 = vpop.f32.mrf.mxu0
    %v135 = vadd.f32 %v63, %v134
    %v136 = vpop.f32.mrf.mxu0
    %137 = vdwg.mxu0
    %v138 = vxor.u32 %v135, 2147483648
    %v139 = vmul.f32 %v138, 1.442695
    %v140 = vpow.pop %v139
    %v141 = vadd.f32 %v140, 1.0
    %v142 = vrcp.pop %v141
    %v143 = vmul.f32 1.0, %v142
    %v144 = vlaneseq
    %v145 = vshrl.u32 %v144, 7
    %v146 = vsub.s32 0, %v145
    %v147 = vrot.slane %v58, %v146
    %v148 = vmul.f32 %v147, %v143
    %v149 = vlaneseq
    %v150 = vshrl.u32 %v149, 7
    %v151 = vsub.s32 0, %v150
    %v152 = vrot.slane %v59, %v151
    %v153 = vadd.f32 %v152, %v148
    %154 = vst [vmem:[#allocation8] sm:$0xff] %v153
    // Predicated region
    $region26: #{tpu_custom_call.1} parent=1 // pred_check
      _
    $region27: #{tpu_custom_call.1} parent=1 // pred_check_branch
      %156 = sbr.rel (0) target = $region29
    $region28: #{tpu_custom_call.1} parent=1 // pred_region
      %s158 = ssub.s32 128, 128
      %159 = vsyncadd [#allocation4], %s158
      %s161 = sshll.u32 [#allocation8], 4
      %s162 = int_to_ptr.vmem [resolvable:$true] %s161
      %164 = dma.vmem_to_hbm [thread:$0]  %s162, 128, %s3, [#allocation4]
    $region29: #{tpu_custom_call.1} parent=1 // pred_fallthru
      _
    // Predicated region
    $region30: #{tpu_custom_call.1} parent=1 // pred_check
      _
    $region31: #{tpu_custom_call.1} parent=1 // pred_check_branch
      %166 = sbr.rel (0) target = $region33
    $region32: #{tpu_custom_call.1} parent=1 // pred_region
      %167 = dma.done [#allocation4], 128
    $region33: #{tpu_custom_call.1} parent=1 // pred_fallthru
      _
    %168 = vsyncpa [#allocation3], 1
    %169 = vsyncpa [#allocation6], 1
    %170 = vsyncpa [#allocation4], 1

</llo_original>
